<compile_context>
chip_gen: v6e
topology: v6e:2x2x1
jax: 0.10.0
libtpu: 0.0.40
codegen_flags: <defaults>
</compile_context>

<pallas_src>
import math

import jax
import jax.numpy as jnp
from jax.experimental import pallas as pl
from jax.experimental.pallas import tpu as pltpu


def _get_pad(size: int, multiple: int):
    new_size = math.ceil(size / multiple) * multiple
    pad = new_size - size
    left = pad // 2
    return left, pad - left


def _round_up(x: int, m: int) -> int:
    return (x + m - 1) // m * m


# Conservative per-step VMEM budget (bytes) for the double-buffered in+out blocks.
# Stays well inside every generation's scoped VMEM (v5e 16 MiB default, v6e 32 MiB,
# v7x 32 MiB of 64 MiB physical); blocks this large already sit near HBM roofline
# for a pure data-movement kernel.
_VMEM_BLOCK_BUDGET = 6 * 1024 * 1024
_VMEM_LIMIT_BYTES = 32 * 1024 * 1024


def _channels_per_block(nc: int, per_channel_bytes: int) -> int:
    cb = max(1, _VMEM_BLOCK_BUDGET // max(1, per_channel_bytes))
    cb = min(cb, nc)
    # Keep at least 2 grid steps when possible so v7x can split the grid across cores.
    cb = min(cb, max(1, -(-nc // 2)))
    return int(cb)


def center_padding(x: jax.Array, multiple: int) -> jax.Array:
    """Pallas implementation of CenterPadding.forward for 4-D NCHW input."""
    N, C, H, W = x.shape
    ph_l, ph_r = _get_pad(H, multiple)
    pw_l, pw_r = _get_pad(W, multiple)
    Hp = H + ph_l + ph_r
    Wp = W + pw_l + pw_r

    if ph_l == 0 and ph_r == 0 and pw_l == 0 and pw_r == 0:
        return x  # already a multiple in both dims: padding is the identity

    NC = N * C
    dtype = x.dtype
    itemsize = jnp.dtype(dtype).itemsize
    # Sublane multiple for the second-minor block dim (8 for 32-bit, 16 bf16, 32 int8).
    sub = max(8, 32 // itemsize)

    params = pltpu.CompilerParams(
        dimension_semantics=("parallel",),
        vmem_limit_bytes=_VMEM_LIMIT_BYTES,
    )

    if pw_l == 0 and pw_r == 0:
        # ---- Lane-dense fast path: only H is padded. Collapse (H, W) -> H*W so stores
        # are H*W lanes wide and the H padding becomes two contiguous zero runs.
        HW, HpW = H * W, Hp * W
        per_ch = 2 * (_round_up(HW, 128) + _round_up(HpW, 128)) * itemsize
        cb = _channels_per_block(NC, per_ch)
        # 2-D blocks: second-minor block dim must be a multiple of `sub` or the full NC.
        if cb < NC:
            cb = (cb // sub) * sub
            if cb == 0:
                cb = min(sub, NC)
        grid = (pl.cdiv(NC, cb),)

        def kernel(x_ref, o_ref):
            # Each output element is written exactly once.
            if ph_l > 0:
                o_ref[:, pl.ds(0, ph_l * W)] = jnp.zeros((cb, ph_l * W), dtype)
            o_ref[:, pl.ds(ph_l * W, HW)] = x_ref[...]
            if ph_r > 0:
                o_ref[:, pl.ds((ph_l + H) * W, ph_r * W)] = jnp.zeros((cb, ph_r * W), dtype)

        out = pl.pallas_call(
            kernel,
            out_shape=jax.ShapeDtypeStruct((NC, HpW), dtype),
            grid=grid,
            in_specs=[pl.BlockSpec((cb, HW), lambda i: (i, 0))],
            out_specs=pl.BlockSpec((cb, HpW), lambda i: (i, 0)),
            compiler_params=params,
        )(x.reshape(NC, HW))
        return out.reshape(N, C, Hp, W)

    # ---- General path: W (and possibly H) padded. Blocks cover full (H, W) planes for
    # `cb` fused channels; the last two block dims equal the array dims so any H/W is
    # legal. Zero only the four border strips and place the input with one interior
    # sub-tile store (all offsets/sizes are compile-time constants).
    # TODO(synk): for pw > 0 with W << 128 a fully lane-dense (NC, Hp*Wp) output would
    # need an in-kernel (H, Wp) -> (H*Wp) relayout/reshape; kept as 3-D stores for
    # robustness of lowering.
    per_ch = 2 * (
        _round_up(H, sub) * _round_up(W, 128)
        + _round_up(Hp, sub) * _round_up(Wp, 128)
    ) * itemsize
    cb = _channels_per_block(NC, per_ch)
    grid = (pl.cdiv(NC, cb),)

    def kernel(x_ref, o_ref):
        # Every output element is written exactly once (no full zero-fill + rewrite).
        if ph_l > 0:
            o_ref[:, pl.ds(0, ph_l), :] = jnp.zeros((cb, ph_l, Wp), dtype)
        if ph_r > 0:
            o_ref[:, pl.ds(ph_l + H, ph_r), :] = jnp.zeros((cb, ph_r, Wp), dtype)
        if pw_l > 0:
            o_ref[:, pl.ds(ph_l, H), pl.ds(0, pw_l)] = jnp.zeros((cb, H, pw_l), dtype)
        if pw_r > 0:
            o_ref[:, pl.ds(ph_l, H), pl.ds(pw_l + W, pw_r)] = jnp.zeros((cb, H, pw_r), dtype)
        o_ref[:, pl.ds(ph_l, H), pl.ds(pw_l, W)] = x_ref[...]

    out = pl.pallas_call(
        kernel,
        out_shape=jax.ShapeDtypeStruct((NC, Hp, Wp), dtype),
        grid=grid,
        in_specs=[pl.BlockSpec((cb, H, W), lambda i: (i, 0, 0))],
        out_specs=pl.BlockSpec((cb, Hp, Wp), lambda i: (i, 0, 0)),
        compiler_params=params,
    )(x.reshape(NC, H, W))
    return out.reshape(N, C, Hp, Wp)


def _reference(x, multiple):
    _, _, H, W = x.shape
    ph = _get_pad(H, multiple)
    pw = _get_pad(W, multiple)
    return jnp.pad(x, ((0, 0), (0, 0), ph, pw))


if __name__ == "__main__":
    multiple = 8
    k1, k2 = jax.random.split(jax.random.PRNGKey(0))

    # Case 1: both H and W padded (asymmetric): H 13 -> 16 (1, 2), W 14 -> 16 (1, 1).
    x1 = jax.random.normal(k1, (2, 4, 13, 14), dtype=jnp.float32)
    y1 = jax.block_until_ready(center_padding(x1, multiple))
    assert y1.shape == (2, 4, 16, 16) and y1.dtype == x1.dtype
    assert bool(jnp.allclose(y1, _reference(x1, multiple))), "mismatch (general path)"

    # Case 2: W already a multiple -> lane-dense flattened path; only H padded (13 -> 16).
    x2 = jax.random.normal(k2, (2, 4, 13, 16), dtype=jnp.float32)
    y2 = jax.block_until_ready(center_padding(x2, multiple))
    assert y2.shape == (2, 4, 16, 16) and y2.dtype == x2.dtype
    assert bool(jnp.allclose(y2, _reference(x2, multiple))), "mismatch (lane-dense path)"

    print("KERNEL_OK")
</pallas_src>

<mosaic_0001>
module attributes {stable_mosaic.version = 11 : i64} {
  func.func @kernel(%arg0: i32, %arg1: memref<4x13x14xf32, #tpu.memory_space<vmem>>, %arg2: memref<4x16x16xf32, #tpu.memory_space<vmem>>) attributes {dimension_semantics = [#tpu.dimension_semantics<parallel>], iteration_bounds = array<i64: 2>, scalar_prefetch = 0 : i64, scratch_operands = 0 : i64, tpu.core_type = #tpu.core_type<tc>, window_params = [{transform_indices = @transform_0, window_bounds = array<i64: 4, 13, 14>}, {transform_indices = @transform_1, window_bounds = array<i64: 4, 16, 16>}]} {
    %cst = arith.constant 0.000000e+00 : f32
    %0 = vector.broadcast %cst : f32 to vector<4x1x16xf32>
    %c0 = arith.constant 0 : index
    %c0_0 = arith.constant 0 : index
    %c0_1 = arith.constant 0 : index
    %1 = vector.load %arg2[%c0, %c0_0, %c0_1] : memref<4x16x16xf32, #tpu.memory_space<vmem>>, vector<4x1x16xf32>
    tpu.vector_store %arg2[%c0, %c0_0, %c0_1], %0 {strides = array<i32>} : memref<4x16x16xf32, #tpu.memory_space<vmem>>, vector<4x1x16xf32>,
    %cst_2 = arith.constant 0.000000e+00 : f32
    %2 = vector.broadcast %cst_2 : f32 to vector<4x2x16xf32>
    %c0_3 = arith.constant 0 : index
    %c14 = arith.constant 14 : index
    %c0_4 = arith.constant 0 : index
    %3 = vector.load %arg2[%c0_3, %c14, %c0_4] : memref<4x16x16xf32, #tpu.memory_space<vmem>>, vector<4x2x16xf32>
    tpu.vector_store %arg2[%c0_3, %c14, %c0_4], %2 {strides = array<i32>} : memref<4x16x16xf32, #tpu.memory_space<vmem>>, vector<4x2x16xf32>,
    %cst_5 = arith.constant 0.000000e+00 : f32
    %4 = vector.broadcast %cst_5 : f32 to vector<4x13x1xf32>
    %c0_6 = arith.constant 0 : index
    %c1 = arith.constant 1 : index
    %c0_7 = arith.constant 0 : index
    %5 = vector.load %arg2[%c0_6, %c1, %c0_7] : memref<4x16x16xf32, #tpu.memory_space<vmem>>, vector<4x13x1xf32>
    tpu.vector_store %arg2[%c0_6, %c1, %c0_7], %4 {strides = array<i32>} : memref<4x16x16xf32, #tpu.memory_space<vmem>>, vector<4x13x1xf32>,
    %cst_8 = arith.constant 0.000000e+00 : f32
    %6 = vector.broadcast %cst_8 : f32 to vector<4x13x1xf32>
    %c0_9 = arith.constant 0 : index
    %c1_10 = arith.constant 1 : index
    %c15 = arith.constant 15 : index
    %7 = vector.load %arg2[%c0_9, %c1_10, %c15] : memref<4x16x16xf32, #tpu.memory_space<vmem>>, vector<4x13x1xf32>
    tpu.vector_store %arg2[%c0_9, %c1_10, %c15], %6 {strides = array<i32>} : memref<4x16x16xf32, #tpu.memory_space<vmem>>, vector<4x13x1xf32>,
    %c0_11 = arith.constant 0 : index
    %c0_12 = arith.constant 0 : index
    %c0_13 = arith.constant 0 : index
    %8 = vector.load %arg1[%c0_11, %c0_12, %c0_13] : memref<4x13x14xf32, #tpu.memory_space<vmem>>, vector<4x13x14xf32>
    %c0_14 = arith.constant 0 : index
    %c1_15 = arith.constant 1 : index
    %c1_16 = arith.constant 1 : index
    %9 = vector.load %arg2[%c0_14, %c1_15, %c1_16] : memref<4x16x16xf32, #tpu.memory_space<vmem>>, vector<4x13x14xf32>
    tpu.vector_store %arg2[%c0_14, %c1_15, %c1_16], %8 {strides = array<i32>} : memref<4x16x16xf32, #tpu.memory_space<vmem>>, vector<4x13x14xf32>,
    return
  }
  func.func @transform_0(%arg0: i32) -> (i32, i32, i32) {
    %c0_i32 = arith.constant 0 : i32
    %c0_i32_0 = arith.constant 0 : i32
    %c0_i32_1 = arith.constant 0 : i32
    return %arg0, %c0_i32, %c0_i32_0 : i32, i32, i32
  }
  func.func @transform_1(%arg0: i32) -> (i32, i32, i32) {
    %c0_i32 = arith.constant 0 : i32
    %c0_i32_0 = arith.constant 0 : i32
    %c0_i32_1 = arith.constant 0 : i32
    return %arg0, %c0_i32, %c0_i32_0 : i32, i32, i32
  }
}

</mosaic_0001>

<llo_original>
// kernel: tpu_custom_call.1
$region0: #{tpu_custom_call.1}
  #allocation0 [shape = 'u32[]', space=smem, size = 0x4, offset = 0x4, fixed_abs, tag = 'smem constant byte address 0x4 - core index']
  #allocation1 [shape = 'u32[144,128]{1,0:T(1,128)}', space=vmem, size = 0x12000, scoped, tag = 'internal scratch']
  %s0 = inlined_call_operand.vmem [shape: f32[8,13,14], index: 0, kind: input, shape index: {}]
  %s1 = inlined_call_operand.hbm [shape: f32[8,16,16], index: 1, kind: output, shape index: {}]
  %s2 = sld [smem:[#allocation0]]
  $region37: #{tpu_custom_call.1} parent=0
    _
  %s4 = ssub.s32 1, %s2
  %s5 = scalar_select 0, %s4, %s2
  $region1: #{tpu_custom_call.1} parent=0
    #allocation2 [shape = 'u8[65536]{0}', space=vmem, size = 0x10000, scoped, tag = 'output window, operand 0']
    #allocation3 [shape = 's32[2]{0}', space=sflag, size = 0x8, scoped, tag = 'scoped memory for tpu_custom_call.1']
    %6 = vsyncpa [#allocation3], 0
    %s7 = scalar_lea.sflag [#allocation3], 1
    %8 = vsyncpa %s7, 0
    loop: start=0, step=1, limit=4
    $region2: #{tpu_custom_call.1} parent=1 // loop_pre_header
      _
    $region3: #{tpu_custom_call.1} parent=1 // loop_header
      %s10 = sphi 0, %s14
      %p11 = scmp.ge.s32.totalorder %s10, 4
      %s20 = sphi 0, %s22
      %s23 = sphi 0, %s20
      %s24 = sphi 0, %s23
      %s40 = sphi 0, %s24
      %s46 = sphi 0, %s48
      %s49 = sphi 0, %s46
      %s50 = sphi 0, %s49
      %s66 = sphi 0, %s50
    $region4: #{tpu_custom_call.1} parent=1 // loop_header_branch
      %13 = sbr.rel (%p11) target = $region8
    $region5: #{tpu_custom_call.1} parent=1 // loop_body
      %s15 = ssub.s32 %s10, 1
      %s16 = ssub.s32 %s10, 2
      %s17 = sadd.s32 %s10, 1
      %s18 = ssub.s32 %s10, %s17
      %p19 = scmp.eq.s32.totalorder %s18, 0
      %s21 = sadd.s32 %s20, 1
      %s22 = scalar_select %p19, %s20, %s21
      %p25 = pneg %p19
      %p26 = scmp.eq.s32.totalorder %s10, 1
      %p27 = por %p25, %p26
      %p28 = scmp.ne.s32.totalorder %s20, %s23
      %p29 = scmp.eq.s32.totalorder %s10, 0
      %p30 = por %p28, %p29
      %p31 = scmp.ne.s32.totalorder %s20, %s23
      %p32 = scmp.eq.s32.totalorder %s15, 1
      %p33 = por %p31, %p32
      %p34 = scmp.ne.s32.totalorder %s23, %s24
      %p35 = scmp.eq.s32.totalorder %s15, 0
      %p36 = por %p34, %p35
      %p37 = scmp.ne.s32.totalorder %s23, %s24
      %p38 = scmp.eq.s32.totalorder %s16, 1
      %p39 = por %p37, %p38
      %p41 = scmp.ne.s32.totalorder %s24, %s40
      %p42 = scmp.eq.s32.totalorder %s16, 0
      %p43 = por %p41, %p42
      %s44 = ssub.s32 %s10, %s17
      %p45 = scmp.eq.s32.totalorder %s44, 0
      %s47 = sadd.s32 %s46, 1
      %s48 = scalar_select %p45, %s46, %s47
      %p51 = pneg %p45
      %p52 = scmp.eq.s32.totalorder %s10, 1
      %p53 = por %p51, %p52
      %p54 = scmp.ne.s32.totalorder %s46, %s49
      %p55 = scmp.eq.s32.totalorder %s10, 0
      %p56 = por %p54, %p55
      %p57 = scmp.ne.s32.totalorder %s46, %s49
      %p58 = scmp.eq.s32.totalorder %s15, 1
      %p59 = por %p57, %p58
      %p60 = scmp.ne.s32.totalorder %s49, %s50
      %p61 = scmp.eq.s32.totalorder %s15, 0
      %p62 = por %p60, %p61
      %p63 = scmp.ne.s32.totalorder %s49, %s50
      %p64 = scmp.eq.s32.totalorder %s16, 1
      %p65 = por %p63, %p64
      %p67 = scmp.ne.s32.totalorder %s50, %s66
      %p68 = scmp.eq.s32.totalorder %s16, 0
      %p69 = por %p67, %p68
      %p70 = scmp.le.s32.totalorder 1, %s10
      %p71 = scmp.lt.s32.totalorder %s10, 3
      %p72 = pnand %p70, %p71
      %p73 = pneg %p72
      // Predicated region
      $region9: #{tpu_custom_call.1} parent=5 // pred_check
        _
      $region10: #{tpu_custom_call.1} parent=5 // pred_check_branch
        %75 = sbr.rel (%p72) target = $region12
      $region11: #{tpu_custom_call.1} parent=5 // pred_region
        %s76 = ssub.s32 %s10, 1
      $region12: #{tpu_custom_call.1} parent=5 // pred_fallthru
        _
      %p77 = scmp.lt.s32.totalorder %s10, 2
      // Predicated region
      $region13: #{tpu_custom_call.1} parent=5 // pred_check
        %p78 = pneg %p77
      $region14: #{tpu_custom_call.1} parent=5 // pred_check_branch
        %80 = sbr.rel (%p78) target = $region16
      $region15: #{tpu_custom_call.1} parent=5 // pred_region
        // Predicated region
        $region17: #{tpu_custom_call.1} parent=15 // pred_check
          %p81 = pneg %p30
        $region18: #{tpu_custom_call.1} parent=15 // pred_check_branch
          %83 = sbr.rel (%p81) target = $region20
        $region19: #{tpu_custom_call.1} parent=15 // pred_region
          %s84 = smul.u32 4, %s10
          %p85 = scmp.lt.s32.totalorder %s84, 7
          %s86 = scalar_select %p85, %s84, 7
          %s87 = smul.addr %s86, 2
          %s88 = smul.addr %s87, 8
          %s89 = scalar_lea.vmem %s0, %s88
          %s90 = smul.u32 4, %s10
        $region20: #{tpu_custom_call.1} parent=15 // pred_fallthru
          _
      $region16: #{tpu_custom_call.1} parent=5 // pred_fallthru
        _
      %p91 = scmp.le.s32.totalorder 1, %s10
      %p92 = scmp.lt.s32.totalorder %s10, 3
      %p93 = pnand %p91, %p92
      %p94 = pneg %p93
      // Predicated region
      $region21: #{tpu_custom_call.1} parent=5 // pred_check
        _
      $region22: #{tpu_custom_call.1} parent=5 // pred_check_branch
        %96 = sbr.rel (%p93) target = $region24
      $region23: #{tpu_custom_call.1} parent=5 // pred_region
        %s97 = ssub.s32 %s10, 1
        %s98 = smul.u32 4, %s15
        %p99 = scmp.lt.s32.totalorder %s98, 7
        %s100 = scalar_select %p99, %s98, 7
        %s101 = smul.addr %s100, 2
        %s102 = smul.addr %s101, 8
        %s103 = scalar_lea.vmem %s0, %s102
        %p104 = pneg %p36
        %p105 = pneg %p33
        %p106 = pneg %p62
        %p107 = pneg %p59
        %s108 = sand.u32 %s49, 1
        %s109 = scalar_lea.sflag [#allocation3], %s108
        %s110 = sand.u32 %s49, 1
        %s111 = smul.addr %s110, 64
        %s112 = scalar_lea.vmem [#allocation2], %s111
        %s113 = smul.u32 4, %s15
        %p114 = scmp.lt.s32.totalorder %s113, 7
        %s115 = scalar_select %p114, %s113, 7
        %s116 = smul.addr %s115, 2
        %s117 = smul.addr %s116, 8
        %s118 = scalar_lea.vmem %s0, %s117
        %s119 = smul.u32 4, %s15
        %s120 = smul.u32 4, %s15
        %vm121 = vcmask 122880
        %122 = vst.msk [vmem:[%s112] sm:$0x1] %vm121, 0.0
        %123 = vst.msk [vmem:[%s112 + $0x10] sm:$0x1] %vm121, 0.0
        %124 = vst.msk [vmem:[%s112 + $0x20] sm:$0x1] %vm121, 0.0
        %125 = vst.msk [vmem:[%s112 + $0x30] sm:$0x1] %vm121, 0.0
        %vm126 = vcmask 123904
        %127 = vst.msk [vmem:[%s112 + $0xe] sm:$0x3] %vm126, 0.0
        %128 = vst.msk [vmem:[%s112 + $0x1e] sm:$0x3] %vm126, 0.0
        %129 = vst.msk [vmem:[%s112 + $0x2e] sm:$0x3] %vm126, 0.0
        %130 = vst.msk [vmem:[%s112 + $0x3e] sm:$0x3] %vm126, 0.0
        %vm131 = vcmask 7168
        %132 = vst.msk [vmem:[%s112 + $0x1] sm:$0xff] %vm131, 0.0
        %vm133 = vcmask 4096
        %134 = vst.msk [vmem:[%s112 + $0x9] sm:$0x1f] %vm133, 0.0
        %135 = vst.msk [vmem:[%s112 + $0x11] sm:$0xff] %vm131, 0.0
        %136 = vst.msk [vmem:[%s112 + $0x19] sm:$0x1f] %vm133, 0.0
        %137 = vst.msk [vmem:[%s112 + $0x21] sm:$0xff] %vm131, 0.0
        %138 = vst.msk [vmem:[%s112 + $0x29] sm:$0x1f] %vm133, 0.0
        %139 = vst.msk [vmem:[%s112 + $0x31] sm:$0xff] %vm131, 0.0
        %140 = vst.msk [vmem:[%s112 + $0x39] sm:$0x1f] %vm133, 0.0
        %vm141 = vcmask 130168
        %142 = vst.msk [vmem:[%s112 + $0x1] sm:$0xff] %vm141, 0.0
        %vm143 = vcmask 127096
        %144 = vst.msk [vmem:[%s112 + $0x9] sm:$0x1f] %vm143, 0.0
        %145 = vst.msk [vmem:[%s112 + $0x11] sm:$0xff] %vm141, 0.0
        %146 = vst.msk [vmem:[%s112 + $0x19] sm:$0x1f] %vm143, 0.0
        %147 = vst.msk [vmem:[%s112 + $0x21] sm:$0xff] %vm141, 0.0
        %148 = vst.msk [vmem:[%s112 + $0x29] sm:$0x1f] %vm143, 0.0
        %149 = vst.msk [vmem:[%s112 + $0x31] sm:$0xff] %vm141, 0.0
        %150 = vst.msk [vmem:[%s112 + $0x39] sm:$0x1f] %vm143, 0.0
        %v151 = vld [vmem:[%s118] sm:$0xff]
        %v152 = vld [vmem:[%s118 + $0x8] sm:$0x1f]
        %v153 = vld [vmem:[%s118 + $0x10] sm:$0xff]
        %v154 = vld [vmem:[%s118 + $0x18] sm:$0x1f]
        %v155 = vld [vmem:[%s118 + $0x20] sm:$0xff]
        %v156 = vld [vmem:[%s118 + $0x28] sm:$0x1f]
        %v157 = vld [vmem:[%s118 + $0x30] sm:$0xff]
        %v158 = vld [vmem:[%s118 + $0x38] sm:$0x1f]
        %167 = vrot.lane.b32.xlu0 %v151, 1
        %v168 = vpop.permute.xlu0 %167
        %169 = vrot.lane.b32.xlu0 %v152, 1
        %v170 = vpop.permute.xlu0 %169
        %171 = vrot.lane.b32.xlu0 %v153, 1
        %v172 = vpop.permute.xlu0 %171
        %173 = vrot.lane.b32.xlu0 %v154, 1
        %v174 = vpop.permute.xlu0 %173
        %175 = vrot.lane.b32.xlu0 %v155, 1
        %v176 = vpop.permute.xlu0 %175
        %177 = vrot.lane.b32.xlu0 %v156, 1
        %v178 = vpop.permute.xlu0 %177
        %179 = vrot.lane.b32.xlu0 %v157, 1
        %v180 = vpop.permute.xlu0 %179
        %181 = vrot.lane.b32.xlu0 %v158, 1
        %v182 = vpop.permute.xlu0 %181
        %vm191 = vcmask 121864
        %192 = vst.msk [vmem:[%s112 + $0x1] sm:$0xff] %vm191, %v168
        %vm193 = vcmask 118792
        %194 = vst.msk [vmem:[%s112 + $0x9] sm:$0x1f] %vm193, %v170
        %195 = vst.msk [vmem:[%s112 + $0x11] sm:$0xff] %vm191, %v172
        %196 = vst.msk [vmem:[%s112 + $0x19] sm:$0x1f] %vm193, %v174
        %197 = vst.msk [vmem:[%s112 + $0x21] sm:$0xff] %vm191, %v176
        %198 = vst.msk [vmem:[%s112 + $0x29] sm:$0x1f] %vm193, %v178
        %199 = vst.msk [vmem:[%s112 + $0x31] sm:$0xff] %vm191, %v180
        %200 = vst.msk [vmem:[%s112 + $0x39] sm:$0x1f] %vm193, %v182
        %s201 = sand.u32 %s49, 1
        %s202 = scalar_lea.sflag [#allocation3], %s201
        %s203 = sand.u32 %s49, 1
        %s204 = smul.addr %s203, 64
        %s205 = scalar_lea.vmem [#allocation2], %s204
        // Predicated region
        $region25: #{tpu_custom_call.1} parent=23 // pred_check
          %p206 = pneg %p59
        $region26: #{tpu_custom_call.1} parent=23 // pred_check_branch
          %208 = sbr.rel (%p206) target = $region28
        $region27: #{tpu_custom_call.1} parent=23 // pred_region
          %s209 = smul.u32 4, %s15
          %s211 = ssub.s32 1024, 1024
          %212 = vsyncadd %s202, %s211
          %s213 = smul.addr %s209, 2
          %s214 = smul.addr %s213, 128
          %s215 = scalar_lea.hbm %s1, %s214
          %s216 = sshll.u32 %s205, 4
          %s217 = int_to_ptr.vmem [resolvable:$true] %s216
          %222 = dma.vmem_to_hbm [thread:$0]  %s217, 1024, %s215, %s202, 128, 128, 8
        $region28: #{tpu_custom_call.1} parent=23 // pred_fallthru
          _
      $region24: #{tpu_custom_call.1} parent=5 // pred_fallthru
        _
      %p223 = scmp.le.s32.totalorder 2, %s10
      // Predicated region
      $region29: #{tpu_custom_call.1} parent=5 // pred_check
        %p224 = pneg %p223
      $region30: #{tpu_custom_call.1} parent=5 // pred_check_branch
        %226 = sbr.rel (%p224) target = $region32
      $region31: #{tpu_custom_call.1} parent=5 // pred_region
        %s227 = ssub.s32 %s10, 2
        // Predicated region
        $region33: #{tpu_custom_call.1} parent=31 // pred_check
          %p228 = pneg %p65
        $region34: #{tpu_custom_call.1} parent=31 // pred_check_branch
          %230 = sbr.rel (%p228) target = $region36
        $region35: #{tpu_custom_call.1} parent=31 // pred_region
          %s231 = sand.u32 %s50, 1
          %s232 = scalar_lea.sflag [#allocation3], %s231
          %s233 = sand.u32 %s50, 1
          %s234 = smul.addr %s233, 64
          %s235 = scalar_lea.vmem [#allocation2], %s234
          %236 = dma.done %s232, 1024
        $region36: #{tpu_custom_call.1} parent=31 // pred_fallthru
          _
      $region32: #{tpu_custom_call.1} parent=5 // pred_fallthru
        _
    $region6: #{tpu_custom_call.1} parent=1 // loop_footer
      %s14 = sadd.s32 1, %s10
    $region7: #{tpu_custom_call.1} parent=1 // loop_footer_branch
      %9 = sbr.rel target = $region3
    $region8: #{tpu_custom_call.1} parent=1 // loop_exit
      _
    %237 = vsyncpa [#allocation3], 1
    %s238 = scalar_lea.sflag [#allocation3], 1
    %239 = vsyncpa %s238, 1

</llo_original>
